<compile_context>
chip_gen: v7x
topology: tpu7x:2x2x1
jax: 0.10.0
libtpu: 0.0.40
codegen_flags: <defaults>
</compile_context>

<pallas_src>
import functools

import jax
import jax.numpy as jnp
from jax.experimental import pallas as pl
from jax.experimental.pallas import tpu as pltpu


_LANE = 128          # output last dim is padded to a multiple of this
_SUBLANE = 8
_MIN_PALLAS_ROWS = 256   # below this, grid-step overhead dominates -> plain jnp


# ----------------------------- kernels ---------------------------------------


def _cs_kernel_3d(x_ref, wt_ref, gb_ref, out_ref):
    """out = (x @ Wt) * gate + eff_bias on one (rows, t_dout) tile.

    x_ref:  (t_rows, Din)       streaming, double-buffered
    wt_ref: (Din, t_dout)       resident weight slab
    gb_ref: (2, t_dout)         row 0 = gate, row 1 = eff_bias (per-batch, f32)
    out_ref:(t_rows, t_dout)
    """
    x = x_ref[...]
    if x.dtype != wt_ref.dtype:
        x = x.astype(wt_ref.dtype)          # bf16 path: cast activations for MXU
    y = jnp.dot(x, wt_ref[...], preferred_element_type=jnp.float32)
    out = y * gb_ref[0:1, :] + gb_ref[1:2, :]          # f32 epilogue
    out_ref[...] = out.astype(out_ref.dtype)


def _cs_kernel_2d(x_ref, wt_ref, gate_ref, bias_ref, out_ref):
    """2-D variant: gate/eff_bias vary per row."""
    x = x_ref[...]
    if x.dtype != wt_ref.dtype:
        x = x.astype(wt_ref.dtype)
    y = jnp.dot(x, wt_ref[...], preferred_element_type=jnp.float32)
    out_ref[...] = (y * gate_ref[...] + bias_ref[...]).astype(out_ref.dtype)


# ----------------------------- VMEM / tiling ----------------------------------


@functools.lru_cache(maxsize=1)
def _vmem_limit_bytes():
    """Generation-aware VMEM budget (v5e/v6e: 128 MiB phys, v7x: 64 MiB/TC)."""
    cap = 64 * 1024 * 1024                      # conservative default (v7x)
    try:
        info = pltpu.get_tpu_info()
        cap = int(getattr(info, "vmem_capacity_bytes", cap) or cap)
    except Exception:
        pass
    # ~75% of physical (96 MiB on v5e/v6e, 48 MiB on v7x), leave compiler headroom.
    return max(32 * 1024 * 1024, min(int(cap * 0.75), cap - (8 << 20)))


def _plan_tiles(n_rows, din, dout_pad, x_itemsize, w_itemsize, out_itemsize):
    """Pick (row tile, dout tile) so resident weight + double-buffered streaming
    tiles fit the VMEM budget."""
    vmem = _vmem_limit_bytes()

    # Weight slab (assume the pipeline may double-buffer it): cap at ~half the
    # budget; tile Dout in multiples of 128 if the full slab would not fit.
    w_budget = vmem // 2
    t_dout = dout_pad
    if 2 * din * t_dout * w_itemsize > w_budget:
        t_dout = (w_budget // (2 * din * w_itemsize)) // _LANE * _LANE
        t_dout = max(_LANE, min(int(t_dout), dout_pad))

    # Remaining budget feeds the double-buffered streaming x / out row tiles
    # (plus the tiny (2, t_dout) gate/bias tile).
    resident = 2 * din * t_dout * w_itemsize + 2 * 2 * t_dout * 4
    remaining = max(vmem - resident, 2 * 1024 * 1024)
    per_row = 2 * (din * x_itemsize + t_dout * out_itemsize)
    t_rows = remaining // max(per_row, 1)
    t_rows = max(_SUBLANE, min(1024, (t_rows // _SUBLANE) * _SUBLANE))
    if n_rows <= t_rows:
        t_rows = n_rows                       # full-extent block is always legal
    return int(t_rows), int(t_dout)


# ----------------------------- params -----------------------------------------


def _pad_cols(a, dout_pad):
    dout = a.shape[-1]
    if dout == dout_pad:
        return a
    pad = [(0, 0)] * (a.ndim - 1) + [(0, dout_pad - dout)]
    return jnp.pad(a, pad)


def make_concat_squash_params(W, b, Wh, Wg, bg, compute_dtype=None):
    """Pre-transpose and lane-pad weights ONCE (hoisted out of the hot path).

    compute_dtype: dtype of the main-layer weight / MXU operands (e.g.
      jnp.bfloat16). Accumulation and the gate/bias epilogue stay f32.
    """
    W, b = jnp.asarray(W), jnp.asarray(b)
    Wh, Wg, bg = jnp.asarray(Wh), jnp.asarray(Wg), jnp.asarray(bg)
    dout = W.shape[0]
    dout_pad = ((dout + _LANE - 1) // _LANE) * _LANE      # lane-dense output
    wdtype = compute_dtype if compute_dtype is not None else W.dtype
    return dict(
        dim_out=dout,
        Wt=_pad_cols(W.T, dout_pad).astype(wdtype),           # (Din, Dout_pad)
        b=_pad_cols(b.astype(jnp.float32), dout_pad),         # (Dout_pad,)
        Wht=_pad_cols(Wh.T.astype(jnp.float32), dout_pad),    # (1+dim_c, Dout_pad)
        Wgt=_pad_cols(Wg.T.astype(jnp.float32), dout_pad),
        bg=_pad_cols(bg.astype(jnp.float32), dout_pad),
    )


# ----------------------------- forward ----------------------------------------


def concat_squash_linear(params, context, x, *, force_pallas=False):
    """Pallas implementation of ConcatSquashLinear.forward.

    context: (B, 1 + dim_c); x: (B, N, dim_in) or (B, dim_in).
    Returns (B, N, dim_out) / (B, dim_out) in x.dtype.
    """
    Wt, b, Wht, Wgt, bg = (params["Wt"], params["b"], params["Wht"],
                           params["Wgt"], params["bg"])
    dout = params["dim_out"]
    din, dout_pad = Wt.shape
    vmem_limit = _vmem_limit_bytes()

    # Tiny hyper-network (K = 1 + dim_c): once per call, in f32, with the main
    # bias folded in:  out = (x @ Wt) * gate + (b * gate + ctx @ Wht).
    ctx32 = context.astype(jnp.float32)
    gate = jax.nn.sigmoid(ctx32 @ Wgt + bg)        # (B, Dout_pad) f32
    eff_bias = b * gate + ctx32 @ Wht              # (B, Dout_pad) f32

    if x.ndim == 3:
        B, N, _ = x.shape

        if (B * N < _MIN_PALLAS_ROWS) and not force_pallas:
            # Tiny problem: per-grid-step overhead dominates; fuse in plain jnp.
            y = jnp.dot(x.astype(Wt.dtype), Wt,
                        preferred_element_type=jnp.float32)
            out = y * gate[:, None, :] + eff_bias[:, None, :]
            return out.astype(x.dtype)[..., :dout]

        t_rows, t_dout = _plan_tiles(N, din, dout_pad, x.dtype.itemsize,
                                     Wt.dtype.itemsize, x.dtype.itemsize)
        gb = jnp.stack([gate, eff_bias], axis=1)   # (B, 2, Dout_pad): one DMA
        grid = (pl.cdiv(dout_pad, t_dout), B, pl.cdiv(N, t_rows))

        out = pl.pallas_call(
            _cs_kernel_3d,
            out_shape=jax.ShapeDtypeStruct((B, N, dout_pad), x.dtype),
            grid=grid,
            in_specs=[
                # streaming x row tiles (double-buffered by the pipeline)
                pl.BlockSpec((None, t_rows, din), lambda jd, bi, js: (bi, js, 0)),
                # weight slab: resident across batch/seq steps, re-DMA'd only
                # when the dout-tile index changes (outermost grid axis)
                pl.BlockSpec((din, t_dout), lambda jd, bi, js: (0, jd)),
                # fused per-batch gate / effective bias
                pl.BlockSpec((None, 2, t_dout), lambda jd, bi, js: (bi, 0, jd)),
            ],
            out_specs=pl.BlockSpec((None, t_rows, t_dout),
                                   lambda jd, bi, js: (bi, js, jd)),
            compiler_params=pltpu.CompilerParams(
                dimension_semantics=("parallel", "parallel", "parallel"),
                vmem_limit_bytes=vmem_limit),
        )(x, Wt, gb)
        return out[..., :dout] if dout_pad != dout else out

    elif x.ndim == 2:
        B, _ = x.shape

        if (B < _MIN_PALLAS_ROWS) and not force_pallas:
            y = jnp.dot(x.astype(Wt.dtype), Wt,
                        preferred_element_type=jnp.float32)
            out = (y * gate + eff_bias).astype(x.dtype)
            return out[..., :dout]

        t_rows, t_dout = _plan_tiles(B, din, dout_pad, x.dtype.itemsize,
                                     Wt.dtype.itemsize, x.dtype.itemsize)
        grid = (pl.cdiv(dout_pad, t_dout), pl.cdiv(B, t_rows))

        out = pl.pallas_call(
            _cs_kernel_2d,
            out_shape=jax.ShapeDtypeStruct((B, dout_pad), x.dtype),
            grid=grid,
            in_specs=[
                pl.BlockSpec((t_rows, din), lambda jd, i: (i, 0)),
                pl.BlockSpec((din, t_dout), lambda jd, i: (0, jd)),
                pl.BlockSpec((t_rows, t_dout), lambda jd, i: (i, jd)),
                pl.BlockSpec((t_rows, t_dout), lambda jd, i: (i, jd)),
            ],
            out_specs=pl.BlockSpec((t_rows, t_dout), lambda jd, i: (i, jd)),
            compiler_params=pltpu.CompilerParams(
                dimension_semantics=("parallel", "parallel"),
                vmem_limit_bytes=vmem_limit),
        )(x, Wt, gate, eff_bias)
        return out[..., :dout] if dout_pad != dout else out

    else:
        raise ValueError(f"x must be 2-D or 3-D, got ndim={x.ndim}")


# ----------------------------- reference --------------------------------------


def concat_squash_linear_ref(context, x, W, b, Wh, Wg, bg):
    hp = jax.lax.Precision.HIGHEST
    gate = jax.nn.sigmoid(jnp.dot(context, Wg.T, precision=hp) + bg)
    bias = jnp.dot(context, Wh.T, precision=hp)
    if x.ndim == 3:
        gate = gate[:, None, :]
        bias = bias[:, None, :]
    return (jnp.dot(x, W.T, precision=hp) + b) * gate + bias


# ----------------------------- main --------------------------------------------


def _make_layer(key, dim_in, dim_out, dim_c):
    kW, kb, kWh, kWg, kbg = jax.random.split(key, 5)
    W = jax.random.uniform(kW, (dim_out, dim_in), jnp.float32,
                           minval=-1.0, maxval=1.0) / jnp.sqrt(dim_in)
    b = jax.random.uniform(kb, (dim_out,), jnp.float32,
                           minval=-1.0, maxval=1.0) / jnp.sqrt(dim_in)
    Wh = jax.random.uniform(kWh, (dim_out, 1 + dim_c), jnp.float32,
                            minval=-1.0, maxval=1.0) / jnp.sqrt(1 + dim_c)
    Wg = jax.random.uniform(kWg, (dim_out, 1 + dim_c), jnp.float32,
                            minval=-1.0, maxval=1.0) / jnp.sqrt(1 + dim_c)
    bg = jax.random.uniform(kbg, (dim_out,), jnp.float32,
                            minval=-1.0, maxval=1.0) / jnp.sqrt(1 + dim_c)
    return W, b, Wh, Wg, bg


if __name__ == "__main__":
    key = jax.random.PRNGKey(0)
    k_layer, k_layer_s, k_ctx, k_ctx_s, k_x3, k_x3s, k_x2 = jax.random.split(key, 7)

    # ---- Lane-aligned layer exercising the Pallas path -----------------------
    B, N, dim_in, dim_out, dim_c = 2, 256, 128, 128, 4
    W, b, Wh, Wg, bg = _make_layer(k_layer, dim_in, dim_out, dim_c)
    params = make_concat_squash_params(W, b, Wh, Wg, bg)     # transpose/pad once

    context = jax.random.normal(k_ctx, (B, 1 + dim_c), jnp.float32)
    x3 = jax.random.normal(k_x3, (B, N, dim_in), jnp.float32)

    out3 = jax.block_until_ready(concat_squash_linear(params, context, x3))
    ref3 = concat_squash_linear_ref(context, x3, W, b, Wh, Wg, bg)
    assert out3.shape == (B, N, dim_out)
    assert jnp.allclose(out3, ref3, atol=2e-3, rtol=2e-3)

    # ---- 2-D path through Pallas ---------------------------------------------
    B2 = 512
    x2 = jax.random.normal(k_x2, (B2, dim_in), jnp.float32)
    ctx2 = jnp.tile(context, (B2 // B, 1))
    out2 = jax.block_until_ready(concat_squash_linear(params, ctx2, x2))
    ref2 = concat_squash_linear_ref(ctx2, x2, W, b, Wh, Wg, bg)
    assert out2.shape == (B2, dim_out)
    assert jnp.allclose(out2, ref2, atol=2e-3, rtol=2e-3)

    # ---- bf16 compute path (bf16 weight slab + bf16 MXU, f32 accum/epilogue) --
    params_bf16 = make_concat_squash_params(W, b, Wh, Wg, bg,
                                            compute_dtype=jnp.bfloat16)
    out3_bf16 = jax.block_until_ready(concat_squash_linear(params_bf16, context, x3))
    assert out3_bf16.shape == (B, N, dim_out)
    assert jnp.allclose(out3_bf16, ref3, atol=1e-1, rtol=1e-1)

    # ---- Tiny, non-lane-aligned layer: fast path AND forced Pallas (padding) --
    Bs, Ns, din_s, dout_s = 2, 8, 32, 32
    Ws, bs, Whs, Wgs, bgs = _make_layer(k_layer_s, din_s, dout_s, dim_c)
    params_s = make_concat_squash_params(Ws, bs, Whs, Wgs, bgs)
    ctx_s = jax.random.normal(k_ctx_s, (Bs, 1 + dim_c), jnp.float32)
    x3s = jax.random.normal(k_x3s, (Bs, Ns, din_s), jnp.float32)
    ref_s = concat_squash_linear_ref(ctx_s, x3s, Ws, bs, Whs, Wgs, bgs)

    out_fast = jax.block_until_ready(concat_squash_linear(params_s, ctx_s, x3s))
    assert out_fast.shape == (Bs, Ns, dout_s)
    assert jnp.allclose(out_fast, ref_s, atol=2e-3, rtol=2e-3)

    out_forced = jax.block_until_ready(
        concat_squash_linear(params_s, ctx_s, x3s, force_pallas=True))
    assert out_forced.shape == (Bs, Ns, dout_s)
    assert jnp.allclose(out_forced, ref_s, atol=2e-3, rtol=2e-3)

    print("KERNEL_OK")
</pallas_src>

<mosaic_0001>
module attributes {stable_mosaic.version = 11 : i64} {
  func.func @_cs_kernel_3d(%arg0: i32, %arg1: i32, %arg2: i32, %arg3: memref<1x256x128xf32, #tpu.memory_space<vmem>>, %arg4: memref<128x128xf32, #tpu.memory_space<vmem>>, %arg5: memref<1x2x128xf32, #tpu.memory_space<vmem>>, %arg6: memref<1x256x128xf32, #tpu.memory_space<vmem>>) attributes {dimension_semantics = [#tpu.dimension_semantics<parallel>, #tpu.dimension_semantics<parallel>, #tpu.dimension_semantics<parallel>], iteration_bounds = array<i64: 1, 2, 1>, scalar_prefetch = 0 : i64, scratch_operands = 0 : i64, tpu.core_type = #tpu.core_type<tc>, window_params = [{transform_indices = @transform_0, window_bounds = array<i64: 1, 256, 128>}, {transform_indices = @transform_1, window_bounds = array<i64: 128, 128>}, {transform_indices = @transform_2, window_bounds = array<i64: 1, 2, 128>}, {transform_indices = @transform_3, window_bounds = array<i64: 1, 256, 128>}]} {
    %c0 = arith.constant 0 : index
    %c0_0 = arith.constant 0 : index
    %c0_1 = arith.constant 0 : index
    %0 = vector.load %arg3[%c0, %c0_0, %c0_1] : memref<1x256x128xf32, #tpu.memory_space<vmem>>, vector<1x256x128xf32>
    %1 = vector.shape_cast %0 : vector<1x256x128xf32> to vector<256x128xf32>
    %c0_2 = arith.constant 0 : index
    %c0_3 = arith.constant 0 : index
    %2 = vector.load %arg4[%c0_2, %c0_3] : memref<128x128xf32, #tpu.memory_space<vmem>>, vector<128x128xf32>
    %cst = arith.constant dense<0.000000e+00> : vector<256x128xf32>
    %3 = tpu.matmul %1, %2, %cst {dimension_numbers = #tpu.dot_dimension_numbers<[1], [0], [0], [1], [0, 0, 1, 1], [], []>} : vector<256x128xf32>, vector<128x128xf32>, vector<256x128xf32> -> vector<256x128xf32>
    %c0_4 = arith.constant 0 : index
    %c0_5 = arith.constant 0 : index
    %c0_6 = arith.constant 0 : index
    %4 = vector.load %arg5[%c0_4, %c0_5, %c0_6] : memref<1x2x128xf32, #tpu.memory_space<vmem>>, vector<1x1x128xf32>
    %5 = vector.shape_cast %4 : vector<1x1x128xf32> to vector<1x128xf32>
    %6 = vector.broadcast %5 : vector<1x128xf32> to vector<256x128xf32>
    %7 = arith.mulf %3, %6 : vector<256x128xf32>
    %c0_7 = arith.constant 0 : index
    %c1 = arith.constant 1 : index
    %c0_8 = arith.constant 0 : index
    %8 = vector.load %arg5[%c0_7, %c1, %c0_8] : memref<1x2x128xf32, #tpu.memory_space<vmem>>, vector<1x1x128xf32>
    %9 = vector.shape_cast %8 : vector<1x1x128xf32> to vector<1x128xf32>
    %10 = vector.broadcast %9 : vector<1x128xf32> to vector<256x128xf32>
    %11 = arith.addf %7, %10 : vector<256x128xf32>
    %c0_9 = arith.constant 0 : index
    %c0_10 = arith.constant 0 : index
    %c0_11 = arith.constant 0 : index
    %12 = vector.load %arg6[%c0_9, %c0_10, %c0_11] : memref<1x256x128xf32, #tpu.memory_space<vmem>>, vector<1x256x128xf32>
    %13 = vector.shape_cast %12 : vector<1x256x128xf32> to vector<256x128xf32>
    %14 = vector.shape_cast %11 : vector<256x128xf32> to vector<1x256x128xf32>
    tpu.vector_store %arg6[%c0_9, %c0_10, %c0_11], %14 {strides = array<i32>} : memref<1x256x128xf32, #tpu.memory_space<vmem>>, vector<1x256x128xf32>,
    return
  }
  func.func @transform_0(%arg0: i32, %arg1: i32, %arg2: i32) -> (i32, i32, i32) {
    %c0_i32 = arith.constant 0 : i32
    %c0_i32_0 = arith.constant 0 : i32
    return %arg1, %arg2, %c0_i32 : i32, i32, i32
  }
  func.func @transform_1(%arg0: i32, %arg1: i32, %arg2: i32) -> (i32, i32) {
    %c0_i32 = arith.constant 0 : i32
    %c0_i32_0 = arith.constant 0 : i32
    return %c0_i32, %arg0 : i32, i32
  }
  func.func @transform_2(%arg0: i32, %arg1: i32, %arg2: i32) -> (i32, i32, i32) {
    %c0_i32 = arith.constant 0 : i32
    %c0_i32_0 = arith.constant 0 : i32
    return %arg1, %c0_i32, %arg0 : i32, i32, i32
  }
  func.func @transform_3(%arg0: i32, %arg1: i32, %arg2: i32) -> (i32, i32, i32) {
    %c0_i32 = arith.constant 0 : i32
    return %arg1, %arg2, %arg0 : i32, i32, i32
  }
}

</mosaic_0001>

<llo_original>
// kernel: tpu_custom_call.1
$region0: #{tpu_custom_call.1}
  #allocation0 [shape = 'u32[]', space=smem, size = 0x4, offset = 0x4, fixed_abs, tag = 'smem constant byte address 0x4 - core index']
  #allocation1 [shape = 'u32[144,128]{1,0:T(1,128)}', space=vmem, size = 0x12000, scoped, tag = 'internal scratch']
  %s0 = inlined_call_operand.hbm [shape: f32[2,256,128], index: 0, kind: input, shape index: {}]
  %s1 = inlined_call_operand.hbm [shape: f32[128,128], index: 1, kind: input, shape index: {}]
  %s2 = inlined_call_operand.vmem [shape: f32[2,2,128], index: 2, kind: input, shape index: {}]
  %s3 = inlined_call_operand.hbm [shape: f32[2,256,128], index: 3, kind: output, shape index: {}]
  %s4 = sld [smem:[#allocation0]]
  $region53: #{tpu_custom_call.1} parent=0
    _
  %s6 = ssub.s32 1, %s4
  %s7 = scalar_select 0, %s6, %s4
  $region1: #{tpu_custom_call.1} parent=0
    #allocation2 [shape = 'u8[262144]{0}', space=vmem, size = 0x40000, scoped, tag = 'input window, operand 0']
    #allocation3 [shape = 's32[2]{0}', space=sflag, size = 0x8, scoped, tag = 'scoped memory for tpu_custom_call.1']
    #allocation4 [shape = 's32[2]{0}', space=sflag, size = 0x8, scoped, tag = 'scoped memory for tpu_custom_call.1']
    #allocation5 [shape = 'u8[65536]{0}', space=vmem, size = 0x10000, scoped, tag = 'input window, operand 1, single buffered']
    #allocation6 [shape = 's32[1]{0}', space=sflag, size = 0x4, scoped, tag = 'scoped memory for tpu_custom_call.1']
    #allocation7 [shape = 'u8[262144]{0}', space=vmem, size = 0x40000, scoped, tag = 'output window, operand 0']
    %8 = vsyncpa [#allocation3], 0
    %s9 = scalar_lea.sflag [#allocation3], 1
    %10 = vsyncpa %s9, 0
    %11 = vsyncpa [#allocation6], 0
    %12 = vsyncpa [#allocation4], 0
    %s13 = scalar_lea.sflag [#allocation4], 1
    %14 = vsyncpa %s13, 0
    loop: start=0, step=1, limit=4
    $region2: #{tpu_custom_call.1} parent=1 // loop_pre_header
      _
    $region3: #{tpu_custom_call.1} parent=1 // loop_header
      %s16 = sphi 0, %s20
      %p17 = scmp.ge.s32.totalorder %s16, 4
      %s23 = sphi 0, %s42
      %s24 = sphi 0, %s38
      %s25 = sphi 0, %s34
      %s26 = sphi 0, %s23
      %s27 = sphi 0, %s24
      %s28 = sphi 0, %s25
      %s29 = sphi 0, %s26
      %s30 = sphi 0, %s27
      %s31 = sphi 0, %s28
      %s47 = sphi 0, %s49
      %s50 = sphi 0, %s47
      %s51 = sphi 0, %s50
      %s67 = sphi 0, %s51
      %s73 = sphi 0, %s75
      %s76 = sphi 0, %s73
      %s77 = sphi 0, %s76
      %s93 = sphi 0, %s77
      %s101 = sphi 0, %s103
      %s104 = sphi 0, %s101
      %s105 = sphi 0, %s104
      %s121 = sphi 0, %s105
      %s131 = sphi 0, %s133
      %s134 = sphi 0, %s131
      %s135 = sphi 0, %s134
      %s151 = sphi 0, %s135
    $region4: #{tpu_custom_call.1} parent=1 // loop_header_branch
      %19 = sbr.rel (%p17) target = $region8
    $region5: #{tpu_custom_call.1} parent=1 // loop_body
      %s21 = ssub.s32 %s16, 1
      %s22 = ssub.s32 %s16, 2
      %s32 = sadd.s32 1, %s25
      %p33 = scmp.ge.s32.totalorder %s32, 1
      %s34 = scalar_select %p33, 0, %s32
      %s35 = sadd.s32 1, %s24
      %s36 = scalar_select %p33, %s35, %s24
      %p37 = scmp.ge.s32.totalorder %s36, 2
      %s38 = scalar_select %p37, 0, %s36
      %s39 = sadd.s32 1, %s23
      %s40 = scalar_select %p37, %s39, %s23
      %p41 = scmp.ge.s32.totalorder %s40, 1
      %s42 = scalar_select %p41, 0, %s40
      %s43 = ssub.s32 %s24, %s38
      %s44 = ssub.s32 %s25, %s34
      %s45 = sor.u32 %s43, %s44
      %p46 = scmp.eq.s32.totalorder %s45, 0
      %s48 = sadd.s32 %s47, 1
      %s49 = scalar_select %p46, %s47, %s48
      %p52 = pneg %p46
      %p53 = scmp.eq.s32.totalorder %s16, 1
      %p54 = por %p52, %p53
      %p55 = scmp.ne.s32.totalorder %s47, %s50
      %p56 = scmp.eq.s32.totalorder %s16, 0
      %p57 = por %p55, %p56
      %p58 = scmp.ne.s32.totalorder %s47, %s50
      %p59 = scmp.eq.s32.totalorder %s21, 1
      %p60 = por %p58, %p59
      %p61 = scmp.ne.s32.totalorder %s50, %s51
      %p62 = scmp.eq.s32.totalorder %s21, 0
      %p63 = por %p61, %p62
      %p64 = scmp.ne.s32.totalorder %s50, %s51
      %p65 = scmp.eq.s32.totalorder %s22, 1
      %p66 = por %p64, %p65
      %p68 = scmp.ne.s32.totalorder %s51, %s67
      %p69 = scmp.eq.s32.totalorder %s22, 0
      %p70 = por %p68, %p69
      %s71 = ssub.s32 %s23, %s42
      %p72 = scmp.eq.s32.totalorder %s71, 0
      %s74 = sadd.s32 %s73, 1
      %s75 = scalar_select %p72, %s73, %s74
      %p78 = pneg %p72
      %p79 = scmp.eq.s32.totalorder %s16, 1
      %p80 = por %p78, %p79
      %p81 = scmp.ne.s32.totalorder %s73, %s76
      %p82 = scmp.eq.s32.totalorder %s16, 0
      %p83 = por %p81, %p82
      %p84 = scmp.ne.s32.totalorder %s73, %s76
      %p85 = scmp.eq.s32.totalorder %s21, 1
      %p86 = por %p84, %p85
      %p87 = scmp.ne.s32.totalorder %s76, %s77
      %p88 = scmp.eq.s32.totalorder %s21, 0
      %p89 = por %p87, %p88
      %p90 = scmp.ne.s32.totalorder %s76, %s77
      %p91 = scmp.eq.s32.totalorder %s22, 1
      %p92 = por %p90, %p91
      %p94 = scmp.ne.s32.totalorder %s77, %s93
      %p95 = scmp.eq.s32.totalorder %s22, 0
      %p96 = por %p94, %p95
      %s97 = ssub.s32 %s24, %s38
      %s98 = ssub.s32 %s23, %s42
      %s99 = sor.u32 %s97, %s98
      %p100 = scmp.eq.s32.totalorder %s99, 0
      %s102 = sadd.s32 %s101, 1
      %s103 = scalar_select %p100, %s101, %s102
      %p106 = pneg %p100
      %p107 = scmp.eq.s32.totalorder %s16, 1
      %p108 = por %p106, %p107
      %p109 = scmp.ne.s32.totalorder %s101, %s104
      %p110 = scmp.eq.s32.totalorder %s16, 0
      %p111 = por %p109, %p110
      %p112 = scmp.ne.s32.totalorder %s101, %s104
      %p113 = scmp.eq.s32.totalorder %s21, 1
      %p114 = por %p112, %p113
      %p115 = scmp.ne.s32.totalorder %s104, %s105
      %p116 = scmp.eq.s32.totalorder %s21, 0
      %p117 = por %p115, %p116
      %p118 = scmp.ne.s32.totalorder %s104, %s105
      %p119 = scmp.eq.s32.totalorder %s22, 1
      %p120 = por %p118, %p119
      %p122 = scmp.ne.s32.totalorder %s105, %s121
      %p123 = scmp.eq.s32.totalorder %s22, 0
      %p124 = por %p122, %p123
      %s125 = ssub.s32 %s24, %s38
      %s126 = ssub.s32 %s25, %s34
      %s127 = sor.u32 %s125, %s126
      %s128 = ssub.s32 %s23, %s42
      %s129 = sor.u32 %s127, %s128
      %p130 = scmp.eq.s32.totalorder %s129, 0
      %s132 = sadd.s32 %s131, 1
      %s133 = scalar_select %p130, %s131, %s132
      %p136 = pneg %p130
      %p137 = scmp.eq.s32.totalorder %s16, 1
      %p138 = por %p136, %p137
      %p139 = scmp.ne.s32.totalorder %s131, %s134
      %p140 = scmp.eq.s32.totalorder %s16, 0
      %p141 = por %p139, %p140
      %p142 = scmp.ne.s32.totalorder %s131, %s134
      %p143 = scmp.eq.s32.totalorder %s21, 1
      %p144 = por %p142, %p143
      %p145 = scmp.ne.s32.totalorder %s134, %s135
      %p146 = scmp.eq.s32.totalorder %s21, 0
      %p147 = por %p145, %p146
      %p148 = scmp.ne.s32.totalorder %s134, %s135
      %p149 = scmp.eq.s32.totalorder %s22, 1
      %p150 = por %p148, %p149
      %p152 = scmp.ne.s32.totalorder %s135, %s151
      %p153 = scmp.eq.s32.totalorder %s22, 0
      %p154 = por %p152, %p153
      %p155 = scmp.le.s32.totalorder 1, %s16
      %p156 = scmp.lt.s32.totalorder %s16, 3
      %p157 = pnand %p155, %p156
      %p158 = pneg %p157
      // Predicated region
      $region9: #{tpu_custom_call.1} parent=5 // pred_check
        _
      $region10: #{tpu_custom_call.1} parent=5 // pred_check_branch
        %160 = sbr.rel (%p157) target = $region12
      $region11: #{tpu_custom_call.1} parent=5 // pred_region
        %s161 = ssub.s32 %s16, 1
        // Predicated region
        $region13: #{tpu_custom_call.1} parent=11 // pred_check
          %p162 = pneg %p89
        $region14: #{tpu_custom_call.1} parent=11 // pred_check_branch
          %164 = sbr.rel (%p162) target = $region16
        $region15: #{tpu_custom_call.1} parent=11 // pred_region
          %s166 = ssub.s32 2048, 2048
          %167 = vsyncadd [#allocation6], %s166
          %s168 = smul.addr %s26, 128
          %s169 = scalar_lea.hbm %s1, %s168
          %s170 = sshll.u32 [#allocation5], 4
          %s171 = int_to_ptr.vmem [resolvable:$true] %s170
          %176 = dma.hbm_to_vmem [thread:$0]  %s169, 2048, %s171, [#allocation6], 128, 128, 8
        $region16: #{tpu_custom_call.1} parent=11 // pred_fallthru
          _
      $region12: #{tpu_custom_call.1} parent=5 // pred_fallthru
        _
      %p177 = scmp.lt.s32.totalorder %s16, 2
      // Predicated region
      $region17: #{tpu_custom_call.1} parent=5 // pred_check
        %p178 = pneg %p177
      $region18: #{tpu_custom_call.1} parent=5 // pred_check_branch
        %180 = sbr.rel (%p178) target = $region20
      $region19: #{tpu_custom_call.1} parent=5 // pred_region
        // Predicated region
        $region21: #{tpu_custom_call.1} parent=19 // pred_check
          %p181 = pneg %p57
        $region22: #{tpu_custom_call.1} parent=19 // pred_check_branch
          %183 = sbr.rel (%p181) target = $region24
        $region23: #{tpu_custom_call.1} parent=19 // pred_region
          %s184 = sand.u32 %s47, 1
          %s185 = scalar_lea.sflag [#allocation3], %s184
          %s186 = sand.u32 %s47, 1
          %s187 = smul.addr %s186, 256
          %s188 = scalar_lea.vmem [#allocation2], %s187
          %s189 = smul.u32 32, %s25
          %s191 = ssub.s32 4096, 4096
          %192 = vsyncadd %s185, %s191
          %s193 = smul.addr %s24, 32
          %s194 = sadd.s32 %s189, %s193
          %s195 = smul.addr %s194, 128
          %s196 = scalar_lea.hbm %s0, %s195
          %s197 = sshll.u32 %s188, 4
          %s198 = int_to_ptr.vmem [resolvable:$true] %s197
          %203 = dma.hbm_to_vmem [thread:$0]  %s196, 4096, %s198, %s185, 128, 128, 8
        $region24: #{tpu_custom_call.1} parent=19 // pred_fallthru
          _
        // Predicated region
        $region25: #{tpu_custom_call.1} parent=19 // pred_check
          %p204 = pneg %p111
        $region26: #{tpu_custom_call.1} parent=19 // pred_check_branch
          %206 = sbr.rel (%p204) target = $region28
        $region27: #{tpu_custom_call.1} parent=19 // pred_region
          %p207 = scmp.lt.s32.totalorder %s24, 1
          %s208 = scalar_select %p207, %s24, 1
          %p209 = scmp.lt.s32.totalorder %s23, 0
          %s210 = scalar_select %p209, %s23, 0
          %s211 = sadd.s32 %s210, %s208
          %s212 = smul.addr %s211, 2
          %s213 = scalar_lea.vmem %s2, %s212
        $region28: #{tpu_custom_call.1} parent=19 // pred_fallthru
          _
      $region20: #{tpu_custom_call.1} parent=5 // pred_fallthru
        _
      %p214 = scmp.le.s32.totalorder 1, %s16
      %p215 = scmp.lt.s32.totalorder %s16, 3
      %p216 = pnand %p214, %p215
      %p217 = pneg %p216
      // Predicated region
      $region29: #{tpu_custom_call.1} parent=5 // pred_check
        _
      $region30: #{tpu_custom_call.1} parent=5 // pred_check_branch
        %219 = sbr.rel (%p216) target = $region32
      $region31: #{tpu_custom_call.1} parent=5 // pred_region
        %s220 = ssub.s32 %s16, 1
        %s221 = sand.u32 %s50, 1
        %s222 = scalar_lea.sflag [#allocation3], %s221
        %s223 = sand.u32 %s50, 1
        %s224 = smul.addr %s223, 256
        %s225 = scalar_lea.vmem [#allocation2], %s224
        // Predicated region
        $region33: #{tpu_custom_call.1} parent=31 // pred_check
          %p226 = pneg %p63
        $region34: #{tpu_custom_call.1} parent=31 // pred_check_branch
          %228 = sbr.rel (%p226) target = $region36
        $region35: #{tpu_custom_call.1} parent=31 // pred_region
          %229 = dma.done %s222, 4096
        $region36: #{tpu_custom_call.1} parent=31 // pred_fallthru
          _
        // Predicated region
        $region37: #{tpu_custom_call.1} parent=31 // pred_check
          %p230 = pneg %p89
        $region38: #{tpu_custom_call.1} parent=31 // pred_check_branch
          %232 = sbr.rel (%p230) target = $region40
        $region39: #{tpu_custom_call.1} parent=31 // pred_region
          %233 = dma.done [#allocation6], 2048
        $region40: #{tpu_custom_call.1} parent=31 // pred_fallthru
          _
        %s234 = sand.u32 %s50, 1
        %s235 = scalar_lea.sflag [#allocation3], %s234
        %s236 = sand.u32 %s50, 1
        %s237 = smul.addr %s236, 256
        %s238 = scalar_lea.vmem [#allocation2], %s237
        %p239 = pneg %p63
        %p240 = pneg %p60
        %p241 = pneg %p89
        %p242 = pneg %p86
        %p243 = scmp.lt.s32.totalorder %s27, 1
        %s244 = scalar_select %p243, %s27, 1
        %p245 = scmp.lt.s32.totalorder %s26, 0
        %s246 = scalar_select %p245, %s26, 0
        %s247 = sadd.s32 %s246, %s244
        %s248 = smul.addr %s247, 2
        %s249 = scalar_lea.vmem %s2, %s248
        %p250 = pneg %p117
        %p251 = pneg %p114
        %p252 = pneg %p147
        %p253 = pneg %p144
        %s254 = sand.u32 %s134, 1
        %s255 = scalar_lea.sflag [#allocation4], %s254
        %s256 = sand.u32 %s134, 1
        %s257 = smul.addr %s256, 256
        %s258 = scalar_lea.vmem [#allocation7], %s257
        %s259 = smul.u32 32, %s28
        %p260 = scmp.lt.s32.totalorder %s27, 1
        %s261 = scalar_select %p260, %s27, 1
        %p262 = scmp.lt.s32.totalorder %s26, 0
        %s263 = scalar_select %p262, %s26, 0
        %s264 = sadd.s32 %s263, %s261
        %s265 = smul.addr %s264, 2
        %s266 = scalar_lea.vmem %s2, %s265
        %s267 = smul.u32 32, %s28
        %v268 = vld [vmem:[%s225] sm:$0xff]
        %v269 = vld [vmem:[%s225 + $0x8] sm:$0xff]
        %v270 = vld [vmem:[%s225 + $0x10] sm:$0xff]
        %v271 = vld [vmem:[%s225 + $0x18] sm:$0xff]
        %v272 = vld [vmem:[%s225 + $0x20] sm:$0xff]
        %v273 = vld [vmem:[%s225 + $0x28] sm:$0xff]
        %v274 = vld [vmem:[%s225 + $0x30] sm:$0xff]
        %v275 = vld [vmem:[%s225 + $0x38] sm:$0xff]
        %v276 = vld [vmem:[%s225 + $0x40] sm:$0xff]
        %v277 = vld [vmem:[%s225 + $0x48] sm:$0xff]
        %v278 = vld [vmem:[%s225 + $0x50] sm:$0xff]
        %v279 = vld [vmem:[%s225 + $0x58] sm:$0xff]
        %v280 = vld [vmem:[%s225 + $0x60] sm:$0xff]
        %v281 = vld [vmem:[%s225 + $0x68] sm:$0xff]
        %v282 = vld [vmem:[%s225 + $0x70] sm:$0xff]
        %v283 = vld [vmem:[%s225 + $0x78] sm:$0xff]
        %v284 = vld [vmem:[%s225 + $0x80] sm:$0xff]
        %v285 = vld [vmem:[%s225 + $0x88] sm:$0xff]
        %v286 = vld [vmem:[%s225 + $0x90] sm:$0xff]
        %v287 = vld [vmem:[%s225 + $0x98] sm:$0xff]
        %v288 = vld [vmem:[%s225 + $0xa0] sm:$0xff]
        %v289 = vld [vmem:[%s225 + $0xa8] sm:$0xff]
        %v290 = vld [vmem:[%s225 + $0xb0] sm:$0xff]
        %v291 = vld [vmem:[%s225 + $0xb8] sm:$0xff]
        %v292 = vld [vmem:[%s225 + $0xc0] sm:$0xff]
        %v293 = vld [vmem:[%s225 + $0xc8] sm:$0xff]
        %v294 = vld [vmem:[%s225 + $0xd0] sm:$0xff]
        %v295 = vld [vmem:[%s225 + $0xd8] sm:$0xff]
        %v296 = vld [vmem:[%s225 + $0xe0] sm:$0xff]
        %v297 = vld [vmem:[%s225 + $0xe8] sm:$0xff]
        %v298 = vld [vmem:[%s225 + $0xf0] sm:$0xff]
        %v299 = vld [vmem:[%s225 + $0xf8] sm:$0xff]
        %v300 = vld [vmem:[#allocation5] sm:$0xff]
        %v301 = vld [vmem:[#allocation5 + $0x8] sm:$0xff]
        %v302 = vld [vmem:[#allocation5 + $0x10] sm:$0xff]
        %v303 = vld [vmem:[#allocation5 + $0x18] sm:$0xff]
        %v304 = vld [vmem:[#allocation5 + $0x20] sm:$0xff]
        %v305 = vld [vmem:[#allocation5 + $0x28] sm:$0xff]
        %v306 = vld [vmem:[#allocation5 + $0x30] sm:$0xff]
        %v307 = vld [vmem:[#allocation5 + $0x38] sm:$0xff]
        %v308 = vld [vmem:[#allocation5 + $0x40] sm:$0xff]
        %v309 = vld [vmem:[#allocation5 + $0x48] sm:$0xff]
        %v310 = vld [vmem:[#allocation5 + $0x50] sm:$0xff]
        %v311 = vld [vmem:[#allocation5 + $0x58] sm:$0xff]
        %v312 = vld [vmem:[#allocation5 + $0x60] sm:$0xff]
        %v313 = vld [vmem:[#allocation5 + $0x68] sm:$0xff]
        %v314 = vld [vmem:[#allocation5 + $0x70] sm:$0xff]
        %v315 = vld [vmem:[#allocation5 + $0x78] sm:$0xff]
        %316 = vmatprep.subr.mxu0 0.0
        %317 = vmatpush1.msra.mxu0 %v300
        %318 = vmatprep.subr.mxu0 0.0
        %319 = vmatpush1.msra.mxu0 %v301
        %320 = vmatprep.subr.mxu0 0.0
        %321 = vmatpush1.msra.mxu0 %v302
        %322 = vmatprep.subr.mxu0 0.0
        %323 = vmatpush1.msra.mxu0 %v303
        %324 = vmatprep.subr.mxu0 0.0
        %325 = vmatpush1.msra.mxu0 %v304
        %326 = vmatprep.subr.mxu0 0.0
        %327 = vmatpush1.msra.mxu0 %v305
        %328 = vmatprep.subr.mxu0 0.0
        %329 = vmatpush1.msra.mxu0 %v306
        %330 = vmatprep.subr.mxu0 0.0
        %331 = vmatpush1.msra.mxu0 %v307
        %332 = vmatprep.subr.mxu0 0.0
        %333 = vmatpush1.msra.mxu0 %v308
        %334 = vmatprep.subr.mxu0 0.0
        %335 = vmatpush1.msra.mxu0 %v309
        %336 = vmatprep.subr.mxu0 0.0
        %337 = vmatpush1.msra.mxu0 %v310
        %338 = vmatprep.subr.mxu0 0.0
        %339 = vmatpush1.msra.mxu0 %v311
        %340 = vmatprep.subr.mxu0 0.0
        %341 = vmatpush1.msra.mxu0 %v312
        %342 = vmatprep.subr.mxu0 0.0
        %343 = vmatpush1.msra.mxu0 %v313
        %344 = vmatprep.subr.mxu0 0.0
        %345 = vmatpush1.msra.mxu0 %v314
        %346 = vmatprep.subr.mxu0 0.0
        %347 = vmatpush1.msra.mxu0 %v315
        %348 = vmatprep.subr.mxu0 0.0
        %349 = vmatpush1.msra.mxu0 0.0
        %350 = vmatprep.subr.mxu0 0.0
        %351 = vmatpush1.msra.mxu0 0.0
        %352 = vmatprep.subr.mxu0 0.0
        %353 = vmatpush1.msra.mxu0 0.0
        %354 = vmatprep.subr.mxu0 0.0
        %355 = vmatpush1.msra.mxu0 0.0
        %356 = vmatprep.subr.mxu0 0.0
        %357 = vmatpush1.msra.mxu0 0.0
        %358 = vmatprep.subr.mxu0 0.0
        %359 = vmatpush1.msra.mxu0 0.0
        %360 = vmatprep.subr.mxu0 0.0
        %361 = vmatpush1.msra.mxu0 0.0
        %362 = vmatprep.subr.mxu0 0.0
        %363 = vmatpush1.msra.mxu0 0.0
        %364 = vmatprep.subr.mxu0 0.0
        %365 = vmatpush1.msra.mxu0 0.0
        %366 = vmatprep.subr.mxu0 0.0
        %367 = vmatpush1.msra.mxu0 0.0
        %368 = vmatprep.subr.mxu0 0.0
        %369 = vmatpush1.msra.mxu0 0.0
        %370 = vmatprep.subr.mxu0 0.0
        %371 = vmatpush1.msra.mxu0 0.0
        %372 = vmatprep.subr.mxu0 0.0
        %373 = vmatpush1.msra.mxu0 0.0
        %374 = vmatprep.subr.mxu0 0.0
        %375 = vmatpush1.msra.mxu0 0.0
        %376 = vmatprep.subr.mxu0 0.0
        %377 = vmatpush1.msra.mxu0 0.0
        %378 = vmatprep.subr.mxu0 0.0
        %379 = vmatpush1.msra.mxu0 0.0
        %380 = vmatprep.mubr.f32.mxu0 0.0
        %381 = vmatmul.mubr.f32.gmra.mrb[0].mxu0 %v268
        %v382 = vpop.f32.mrb[0].mxu0
        %v383 = vadd.f32 0.0, %v382
        %v384 = vpop.f32.mrb[0].mxu0
        %385 = vmatprep.mubr.f32.mxu0 0.0
        %386 = vmatmul.mubr.f32.gmra.mrb[0].mxu0 %v269
        %v387 = vpop.f32.mrb[0].mxu0
        %v388 = vadd.f32 0.0, %v387
        %v389 = vpop.f32.mrb[0].mxu0
        %390 = vmatprep.mubr.f32.mxu0 0.0
        %391 = vmatmul.mubr.f32.gmra.mrb[0].mxu0 %v270
        %v392 = vpop.f32.mrb[0].mxu0
        %v393 = vadd.f32 0.0, %v392
        %v394 = vpop.f32.mrb[0].mxu0
        %395 = vmatprep.mubr.f32.mxu0 0.0
        %396 = vmatmul.mubr.f32.gmra.mrb[0].mxu0 %v271
        %v397 = vpop.f32.mrb[0].mxu0
        %v398 = vadd.f32 0.0, %v397
        %v399 = vpop.f32.mrb[0].mxu0
        %400 = vmatprep.mubr.f32.mxu0 0.0
        %401 = vmatmul.mubr.f32.gmra.mrb[0].mxu0 %v272
        %v402 = vpop.f32.mrb[0].mxu0
        %v403 = vadd.f32 0.0, %v402
        %v404 = vpop.f32.mrb[0].mxu0
        %405 = vmatprep.mubr.f32.mxu0 0.0
        %406 = vmatmul.mubr.f32.gmra.mrb[0].mxu0 %v273
        %v407 = vpop.f32.mrb[0].mxu0
        %v408 = vadd.f32 0.0, %v407
        %v409 = vpop.f32.mrb[0].mxu0
        %410 = vmatprep.mubr.f32.mxu0 0.0
        %411 = vmatmul.mubr.f32.gmra.mrb[0].mxu0 %v274
        %v412 = vpop.f32.mrb[0].mxu0
        %v413 = vadd.f32 0.0, %v412
        %v414 = vpop.f32.mrb[0].mxu0
        %415 = vmatprep.mubr.f32.mxu0 0.0
        %416 = vmatmul.mubr.f32.gmra.mrb[0].mxu0 %v275
        %v417 = vpop.f32.mrb[0].mxu0
        %v418 = vadd.f32 0.0, %v417
        %v419 = vpop.f32.mrb[0].mxu0
        %420 = vmatprep.mubr.f32.mxu0 0.0
        %421 = vmatmul.mubr.f32.gmra.mrb[0].mxu0 %v276
        %v422 = vpop.f32.mrb[0].mxu0
        %v423 = vadd.f32 0.0, %v422
        %v424 = vpop.f32.mrb[0].mxu0
        %425 = vmatprep.mubr.f32.mxu0 0.0
        %426 = vmatmul.mubr.f32.gmra.mrb[0].mxu0 %v277
        %v427 = vpop.f32.mrb[0].mxu0
        %v428 = vadd.f32 0.0, %v427
        %v429 = vpop.f32.mrb[0].mxu0
        %430 = vmatprep.mubr.f32.mxu0 0.0
        %431 = vmatmul.mubr.f32.gmra.mrb[0].mxu0 %v278
        %v432 = vpop.f32.mrb[0].mxu0
        %v433 = vadd.f32 0.0, %v432
        %v434 = vpop.f32.mrb[0].mxu0
        %435 = vmatprep.mubr.f32.mxu0 0.0
        %436 = vmatmul.mubr.f32.gmra.mrb[0].mxu0 %v279
        %v437 = vpop.f32.mrb[0].mxu0
        %v438 = vadd.f32 0.0, %v437
        %v439 = vpop.f32.mrb[0].mxu0
        %440 = vmatprep.mubr.f32.mxu0 0.0
        %441 = vmatmul.mubr.f32.gmra.mrb[0].mxu0 %v280
        %v442 = vpop.f32.mrb[0].mxu0
        %v443 = vadd.f32 0.0, %v442
        %v444 = vpop.f32.mrb[0].mxu0
        %445 = vmatprep.mubr.f32.mxu0 0.0
        %446 = vmatmul.mubr.f32.gmra.mrb[0].mxu0 %v281
        %v447 = vpop.f32.mrb[0].mxu0
        %v448 = vadd.f32 0.0, %v447
        %v449 = vpop.f32.mrb[0].mxu0
        %450 = vmatprep.mubr.f32.mxu0 0.0
        %451 = vmatmul.mubr.f32.gmra.mrb[0].mxu0 %v282
        %v452 = vpop.f32.mrb[0].mxu0
        %v453 = vadd.f32 0.0, %v452
        %v454 = vpop.f32.mrb[0].mxu0
        %455 = vmatprep.mubr.f32.mxu0 0.0
        %456 = vmatmul.mubr.f32.gmra.mrb[0].mxu0 %v283
        %v457 = vpop.f32.mrb[0].mxu0
        %v458 = vadd.f32 0.0, %v457
        %v459 = vpop.f32.mrb[0].mxu0
        %460 = vmatprep.mubr.f32.mxu0 0.0
        %461 = vmatmul.mubr.f32.gmra.mrb[0].mxu0 %v284
        %v462 = vpop.f32.mrb[0].mxu0
        %v463 = vadd.f32 0.0, %v462
        %v464 = vpop.f32.mrb[0].mxu0
        %465 = vmatprep.mubr.f32.mxu0 0.0
        %466 = vmatmul.mubr.f32.gmra.mrb[0].mxu0 %v285
        %v467 = vpop.f32.mrb[0].mxu0
        %v468 = vadd.f32 0.0, %v467
        %v469 = vpop.f32.mrb[0].mxu0
        %470 = vmatprep.mubr.f32.mxu0 0.0
        %471 = vmatmul.mubr.f32.gmra.mrb[0].mxu0 %v286
        %v472 = vpop.f32.mrb[0].mxu0
        %v473 = vadd.f32 0.0, %v472
        %v474 = vpop.f32.mrb[0].mxu0
        %475 = vmatprep.mubr.f32.mxu0 0.0
        %476 = vmatmul.mubr.f32.gmra.mrb[0].mxu0 %v287
        %v477 = vpop.f32.mrb[0].mxu0
        %v478 = vadd.f32 0.0, %v477
        %v479 = vpop.f32.mrb[0].mxu0
        %480 = vmatprep.mubr.f32.mxu0 0.0
        %481 = vmatmul.mubr.f32.gmra.mrb[0].mxu0 %v288
        %v482 = vpop.f32.mrb[0].mxu0
        %v483 = vadd.f32 0.0, %v482
        %v484 = vpop.f32.mrb[0].mxu0
        %485 = vmatprep.mubr.f32.mxu0 0.0
        %486 = vmatmul.mubr.f32.gmra.mrb[0].mxu0 %v289
        %v487 = vpop.f32.mrb[0].mxu0
        %v488 = vadd.f32 0.0, %v487
        %v489 = vpop.f32.mrb[0].mxu0
        %490 = vmatprep.mubr.f32.mxu0 0.0
        %491 = vmatmul.mubr.f32.gmra.mrb[0].mxu0 %v290
        %v492 = vpop.f32.mrb[0].mxu0
        %v493 = vadd.f32 0.0, %v492
        %v494 = vpop.f32.mrb[0].mxu0
        %495 = vmatprep.mubr.f32.mxu0 0.0
        %496 = vmatmul.mubr.f32.gmra.mrb[0].mxu0 %v291
        %v497 = vpop.f32.mrb[0].mxu0
        %v498 = vadd.f32 0.0, %v497
        %v499 = vpop.f32.mrb[0].mxu0
        %500 = vmatprep.mubr.f32.mxu0 0.0
        %501 = vmatmul.mubr.f32.gmra.mrb[0].mxu0 %v292
        %v502 = vpop.f32.mrb[0].mxu0
        %v503 = vadd.f32 0.0, %v502
        %v504 = vpop.f32.mrb[0].mxu0
        %505 = vmatprep.mubr.f32.mxu0 0.0
        %506 = vmatmul.mubr.f32.gmra.mrb[0].mxu0 %v293
        %v507 = vpop.f32.mrb[0].mxu0
        %v508 = vadd.f32 0.0, %v507
        %v509 = vpop.f32.mrb[0].mxu0
        %510 = vmatprep.mubr.f32.mxu0 0.0
        %511 = vmatmul.mubr.f32.gmra.mrb[0].mxu0 %v294
        %v512 = vpop.f32.mrb[0].mxu0
        %v513 = vadd.f32 0.0, %v512
        %v514 = vpop.f32.mrb[0].mxu0
        %515 = vmatprep.mubr.f32.mxu0 0.0
        %516 = vmatmul.mubr.f32.gmra.mrb[0].mxu0 %v295
        %v517 = vpop.f32.mrb[0].mxu0
        %v518 = vadd.f32 0.0, %v517
        %v519 = vpop.f32.mrb[0].mxu0
        %520 = vmatprep.mubr.f32.mxu0 0.0
        %521 = vmatmul.mubr.f32.gmra.mrb[0].mxu0 %v296
        %v522 = vpop.f32.mrb[0].mxu0
        %v523 = vadd.f32 0.0, %v522
        %v524 = vpop.f32.mrb[0].mxu0
        %525 = vmatprep.mubr.f32.mxu0 0.0
        %526 = vmatmul.mubr.f32.gmra.mrb[0].mxu0 %v297
        %v527 = vpop.f32.mrb[0].mxu0
        %v528 = vadd.f32 0.0, %v527
        %v529 = vpop.f32.mrb[0].mxu0
        %530 = vmatprep.mubr.f32.mxu0 0.0
        %531 = vmatmul.mubr.f32.gmra.mrb[0].mxu0 %v298
        %v532 = vpop.f32.mrb[0].mxu0
        %v533 = vadd.f32 0.0, %v532
        %v534 = vpop.f32.mrb[0].mxu0
        %535 = vmatprep.mubr.f32.mxu0 0.0
        %536 = vmatmul.mubr.f32.gmra.mrb[0].mxu0 %v299
        %v537 = vpop.f32.mrb[0].mxu0
        %v538 = vadd.f32 0.0, %v537
        %v539 = vpop.f32.mrb[0].mxu0
        %540 = vdwg.mxu0
        %v541 = vld [vmem:[%s266] sm:$0x1]
        %v542 = vlaneseq
        %v543 = vshrl.u32 %v542, 7
        %v544 = vsub.s32 0, %v543
        %v545 = vrot.slane %v541, %v544
        %v546 = vmul.f32 %v383, %v545
        %v547 = vmul.f32 %v388, %v545
        %v548 = vmul.f32 %v393, %v545
        %v549 = vmul.f32 %v398, %v545
        %v550 = vmul.f32 %v403, %v545
        %v551 = vmul.f32 %v408, %v545
        %v552 = vmul.f32 %v413, %v545
        %v553 = vmul.f32 %v418, %v545
        %v554 = vmul.f32 %v423, %v545
        %v555 = vmul.f32 %v428, %v545
        %v556 = vmul.f32 %v433, %v545
        %v557 = vmul.f32 %v438, %v545
        %v558 = vmul.f32 %v443, %v545
        %v559 = vmul.f32 %v448, %v545
        %v560 = vmul.f32 %v453, %v545
        %v561 = vmul.f32 %v458, %v545
        %v562 = vmul.f32 %v463, %v545
        %v563 = vmul.f32 %v468, %v545
        %v564 = vmul.f32 %v473, %v545
        %v565 = vmul.f32 %v478, %v545
        %v566 = vmul.f32 %v483, %v545
        %v567 = vmul.f32 %v488, %v545
        %v568 = vmul.f32 %v493, %v545
        %v569 = vmul.f32 %v498, %v545
        %v570 = vmul.f32 %v503, %v545
        %v571 = vmul.f32 %v508, %v545
        %v572 = vmul.f32 %v513, %v545
        %v573 = vmul.f32 %v518, %v545
        %v574 = vmul.f32 %v523, %v545
        %v575 = vmul.f32 %v528, %v545
        %v576 = vmul.f32 %v533, %v545
        %v577 = vmul.f32 %v538, %v545
        %v578 = vld [vmem:[%s266 + $0x1] sm:$0x1]
        %v579 = vlaneseq
        %v580 = vshrl.u32 %v579, 7
        %v581 = vsub.s32 0, %v580
        %v582 = vrot.slane %v578, %v581
        %v583 = vadd.f32 %v546, %v582
        %v584 = vadd.f32 %v547, %v582
        %v585 = vadd.f32 %v548, %v582
        %v586 = vadd.f32 %v549, %v582
        %v587 = vadd.f32 %v550, %v582
        %v588 = vadd.f32 %v551, %v582
        %v589 = vadd.f32 %v552, %v582
        %v590 = vadd.f32 %v553, %v582
        %v591 = vadd.f32 %v554, %v582
        %v592 = vadd.f32 %v555, %v582
        %v593 = vadd.f32 %v556, %v582
        %v594 = vadd.f32 %v557, %v582
        %v595 = vadd.f32 %v558, %v582
        %v596 = vadd.f32 %v559, %v582
        %v597 = vadd.f32 %v560, %v582
        %v598 = vadd.f32 %v561, %v582
        %v599 = vadd.f32 %v562, %v582
        %v600 = vadd.f32 %v563, %v582
        %v601 = vadd.f32 %v564, %v582
        %v602 = vadd.f32 %v565, %v582
        %v603 = vadd.f32 %v566, %v582
        %v604 = vadd.f32 %v567, %v582
        %v605 = vadd.f32 %v568, %v582
        %v606 = vadd.f32 %v569, %v582
        %v607 = vadd.f32 %v570, %v582
        %v608 = vadd.f32 %v571, %v582
        %v609 = vadd.f32 %v572, %v582
        %v610 = vadd.f32 %v573, %v582
        %v611 = vadd.f32 %v574, %v582
        %v612 = vadd.f32 %v575, %v582
        %v613 = vadd.f32 %v576, %v582
        %v614 = vadd.f32 %v577, %v582
        %615 = vst [vmem:[%s258] sm:$0xff] %v583
        %616 = vst [vmem:[%s258 + $0x8] sm:$0xff] %v584
        %617 = vst [vmem:[%s258 + $0x10] sm:$0xff] %v585
        %618 = vst [vmem:[%s258 + $0x18] sm:$0xff] %v586
        %619 = vst [vmem:[%s258 + $0x20] sm:$0xff] %v587
        %620 = vst [vmem:[%s258 + $0x28] sm:$0xff] %v588
        %621 = vst [vmem:[%s258 + $0x30] sm:$0xff] %v589
        %622 = vst [vmem:[%s258 + $0x38] sm:$0xff] %v590
        %623 = vst [vmem:[%s258 + $0x40] sm:$0xff] %v591
        %624 = vst [vmem:[%s258 + $0x48] sm:$0xff] %v592
        %625 = vst [vmem:[%s258 + $0x50] sm:$0xff] %v593
        %626 = vst [vmem:[%s258 + $0x58] sm:$0xff] %v594
        %627 = vst [vmem:[%s258 + $0x60] sm:$0xff] %v595
        %628 = vst [vmem:[%s258 + $0x68] sm:$0xff] %v596
        %629 = vst [vmem:[%s258 + $0x70] sm:$0xff] %v597
        %630 = vst [vmem:[%s258 + $0x78] sm:$0xff] %v598
        %631 = vst [vmem:[%s258 + $0x80] sm:$0xff] %v599
        %632 = vst [vmem:[%s258 + $0x88] sm:$0xff] %v600
        %633 = vst [vmem:[%s258 + $0x90] sm:$0xff] %v601
        %634 = vst [vmem:[%s258 + $0x98] sm:$0xff] %v602
        %635 = vst [vmem:[%s258 + $0xa0] sm:$0xff] %v603
        %636 = vst [vmem:[%s258 + $0xa8] sm:$0xff] %v604
        %637 = vst [vmem:[%s258 + $0xb0] sm:$0xff] %v605
        %638 = vst [vmem:[%s258 + $0xb8] sm:$0xff] %v606
        %639 = vst [vmem:[%s258 + $0xc0] sm:$0xff] %v607
        %640 = vst [vmem:[%s258 + $0xc8] sm:$0xff] %v608
        %641 = vst [vmem:[%s258 + $0xd0] sm:$0xff] %v609
        %642 = vst [vmem:[%s258 + $0xd8] sm:$0xff] %v610
        %643 = vst [vmem:[%s258 + $0xe0] sm:$0xff] %v611
        %644 = vst [vmem:[%s258 + $0xe8] sm:$0xff] %v612
        %645 = vst [vmem:[%s258 + $0xf0] sm:$0xff] %v613
        %646 = vst [vmem:[%s258 + $0xf8] sm:$0xff] %v614
        %s647 = sand.u32 %s134, 1
        %s648 = scalar_lea.sflag [#allocation4], %s647
        %s649 = sand.u32 %s134, 1
        %s650 = smul.addr %s649, 256
        %s651 = scalar_lea.vmem [#allocation7], %s650
        // Predicated region
        $region41: #{tpu_custom_call.1} parent=31 // pred_check
          %p652 = pneg %p144
        $region42: #{tpu_custom_call.1} parent=31 // pred_check_branch
          %654 = sbr.rel (%p652) target = $region44
        $region43: #{tpu_custom_call.1} parent=31 // pred_region
          %s655 = smul.u32 32, %s28
          %s657 = ssub.s32 4096, 4096
          %658 = vsyncadd %s648, %s657
          %s659 = sadd.s32 %s26, %s655
          %s660 = smul.addr %s27, 32
          %s661 = sadd.s32 %s659, %s660
          %s662 = smul.addr %s661, 128
          %s663 = scalar_lea.hbm %s3, %s662
          %s664 = sshll.u32 %s651, 4
          %s665 = int_to_ptr.vmem [resolvable:$true] %s664
          %670 = dma.vmem_to_hbm [thread:$0]  %s665, 4096, %s663, %s648, 128, 128, 8
        $region44: #{tpu_custom_call.1} parent=31 // pred_fallthru
          _
      $region32: #{tpu_custom_call.1} parent=5 // pred_fallthru
        _
      %p671 = scmp.le.s32.totalorder 2, %s16
      // Predicated region
      $region45: #{tpu_custom_call.1} parent=5 // pred_check
        %p672 = pneg %p671
      $region46: #{tpu_custom_call.1} parent=5 // pred_check_branch
        %674 = sbr.rel (%p672) target = $region48
      $region47: #{tpu_custom_call.1} parent=5 // pred_region
        %s675 = ssub.s32 %s16, 2
        // Predicated region
        $region49: #{tpu_custom_call.1} parent=47 // pred_check
          %p676 = pneg %p150
        $region50: #{tpu_custom_call.1} parent=47 // pred_check_branch
          %678 = sbr.rel (%p676) target = $region52
        $region51: #{tpu_custom_call.1} parent=47 // pred_region
          %s679 = sand.u32 %s135, 1
          %s680 = scalar_lea.sflag [#allocation4], %s679
          %s681 = sand.u32 %s135, 1
          %s682 = smul.addr %s681, 256
          %s683 = scalar_lea.vmem [#allocation7], %s682
          %684 = dma.done %s680, 4096
        $region52: #{tpu_custom_call.1} parent=47 // pred_fallthru
          _
      $region48: #{tpu_custom_call.1} parent=5 // pred_fallthru
        _
    $region6: #{tpu_custom_call.1} parent=1 // loop_footer
      %s20 = sadd.s32 1, %s16
    $region7: #{tpu_custom_call.1} parent=1 // loop_footer_branch
      %15 = sbr.rel target = $region3
    $region8: #{tpu_custom_call.1} parent=1 // loop_exit
      _
    %685 = vsyncpa [#allocation3], 1
    %s686 = scalar_lea.sflag [#allocation3], 1
    %687 = vsyncpa %s686, 1
    %688 = vsyncpa [#allocation6], 1
    %689 = vsyncpa [#allocation4], 1
    %s690 = scalar_lea.sflag [#allocation4], 1
    %691 = vsyncpa %s690, 1

</llo_original>
